<compile_context>
chip_gen: v7x
topology: tpu7x:2x2x1
jax: 0.10.0
libtpu: 0.0.40
codegen_flags: <defaults>
</compile_context>

<pallas_src>
import functools

import jax
import jax.numpy as jnp
import numpy as np
from jax.experimental import pallas as pl
from jax.experimental.pallas import tpu as pltpu


# ----------------------------------------------------------------------------
# Kernel
# ----------------------------------------------------------------------------
def _bary_affine_kernel(x_ref, y_ref, a_ref, b_ref, o_ref, *, use_mxu_gather):
    """Z = A[y] + B[y] * X for one (tn, td) tile."""
    x = x_ref[...]            # (TN, TD) f32
    y = y_ref[...]            # (TN, 1)  i32
    a = a_ref[...]            # (C,  TD) f32
    b = b_ref[...]            # (C,  TD) f32
    tn, td = x.shape
    c = a.shape[0]

    if use_mxu_gather:
        # Per-row gather of (A[y], B[y]) as a one-hot matmul on the MXU
        # (vector-extended slot is otherwise idle in this mem-bound kernel).
        classes = jax.lax.broadcasted_iota(jnp.int32, (tn, c), 1)   # (TN, C)
        onehot = (y == classes).astype(jnp.float32)                 # (TN, C)
        a_y = jnp.dot(onehot, a, preferred_element_type=jnp.float32)
        b_y = jnp.dot(onehot, b, preferred_element_type=jnp.float32)
    else:
        # Tiny class count: unrolled VPU select chain.  Broadcast the labels
        # ONCE (JAX does not CSE broadcast_in_dim) and seed with class 0 so
        # any out-of-range label degenerates to class 0 instead of garbage.
        yb = jnp.broadcast_to(y, (tn, td))
        a_y = jnp.broadcast_to(a[0][None, :], (tn, td))
        b_y = jnp.broadcast_to(b[0][None, :], (tn, td))
        for cls in range(1, c):
            m = yb == cls
            a_y = jnp.where(m, a[cls][None, :], a_y)
            b_y = jnp.where(m, b[cls][None, :], b_y)

    o_ref[...] = (a_y + b_y * x).astype(o_ref.dtype)


# ----------------------------------------------------------------------------
# Wrapper helpers
# ----------------------------------------------------------------------------
def _round_up(v, m):
    return ((v + m - 1) // m) * m


def _cdiv(a, b):
    return -(-a // b)


def _vmem_capacity_bytes():
    try:
        return int(pltpu.get_tpu_info().vmem_capacity_bytes)
    except Exception:
        return 64 << 20       # conservative fallback (v7x per-TensorCore)


def _use_mxu_gather(c):
    """Route the per-row gather to the MXU except for tiny C or on v5e."""
    if c <= 3:
        return False
    kind = ""
    try:
        kind = jax.devices()[0].device_kind.lower()
    except Exception:
        pass
    if "v5 lite" in kind or "v5e" in kind or "v5lite" in kind:
        return c > 8          # v5e is HBM-bound anyway; keep the VPU selects
    return True


def _choose_tiles(n, d_pad):
    """Pick (tn, td, n_tiles, d_tiles) for padded shape (n, d_pad)."""
    # D tile: lane-dense multiple of 128 dividing d_pad, capped at 2048.
    if d_pad <= 2048:
        td = d_pad
    else:
        td = 128
        t = 256
        while t <= 2048:
            if d_pad % t == 0:
                td = t
            t += 128
    d_tiles = d_pad // td

    # Row tile: ~2 MiB per streamed array (X and Z each) per grid step, so a
    # step moves ~4+ MiB and the ~0.35 us fixed per-step overhead is hidden.
    target_rows = max(8, (2 << 20) // (td * 4))
    tn = min(2048, _round_up(target_rows, 8))
    # Keep at least 2 N tiles when possible (v7x has 2 TensorCores).
    tn = max(8, min(tn, _round_up(_cdiv(n, 2), 8)))
    n_tiles = _cdiv(n, tn)
    # Prefer an even N-tile count when the grid is small (megacore balance).
    if 1 < n_tiles < 16 and n_tiles % 2 == 1:
        tn2 = max(8, _round_up(_cdiv(n, n_tiles + 1), 8))
        if _cdiv(n, tn2) % 2 == 0:
            tn = tn2
            n_tiles = _cdiv(n, tn)
    return tn, td, n_tiles, d_tiles


# ----------------------------------------------------------------------------
# Wrapper
# ----------------------------------------------------------------------------
@jax.jit
def gaussian_bary_affine_transform(x, y, a, b):
    """x: (N, D) f32, y: (N,) int labels, a/b: (C, D) per-class affine params."""
    n, d = x.shape
    c = a.shape[0]

    x = x.astype(jnp.float32)
    a = a.astype(jnp.float32)
    b = b.astype(jnp.float32)
    # Clamp labels into [0, C) so an out-of-range label can't silently produce
    # an all-zero gather.  (The PyTorch/sklearn reference would index-error.)
    y = jnp.clip(y.astype(jnp.int32), 0, c - 1).reshape(n, 1)

    # Pad D to a lane-dense multiple of 128 (unmasked full-lane stores) and N
    # to the chosen row tile; padded rows/cols are sliced off at the end.
    d_pad = _round_up(d, 128)
    tn, td, n_tiles, d_tiles = _choose_tiles(n, d_pad)
    n_pad = n_tiles * tn

    if d_pad != d:
        x = jnp.pad(x, ((0, 0), (0, d_pad - d)))
        a = jnp.pad(a, ((0, 0), (0, d_pad - d)))
        b = jnp.pad(b, ((0, 0), (0, d_pad - d)))
    if n_pad != n:
        x = jnp.pad(x, ((0, n_pad - n), (0, 0)))
        y = jnp.pad(y, ((0, n_pad - n), (0, 0)))   # padded labels = class 0 (valid)

    kernel = functools.partial(_bary_affine_kernel,
                               use_mxu_gather=_use_mxu_gather(c))

    if d_tiles == 1:
        # 1-D grid over rows; the single D block of A/B stays resident.
        grid = (n_tiles,)
        in_specs = [
            pl.BlockSpec((tn, td), lambda i: (i, 0)),    # X tile
            pl.BlockSpec((tn, 1), lambda i: (i, 0)),     # labels
            pl.BlockSpec((c, td), lambda i: (0, 0)),     # A (per-class offset)
            pl.BlockSpec((c, td), lambda i: (0, 0)),     # B (per-class scale)
        ]
        out_spec = pl.BlockSpec((tn, td), lambda i: (i, 0))
        dims = ("parallel",)
    else:
        # D is the slow (outer) axis so the (C, td) A/B blocks keep the same
        # block index across the whole inner N sweep (no re-DMA per step).
        grid = (d_tiles, n_tiles)
        in_specs = [
            pl.BlockSpec((tn, td), lambda dj, ni: (ni, dj)),
            pl.BlockSpec((tn, 1), lambda dj, ni: (ni, 0)),
            pl.BlockSpec((c, td), lambda dj, ni: (0, dj)),
            pl.BlockSpec((c, td), lambda dj, ni: (0, dj)),
        ]
        out_spec = pl.BlockSpec((tn, td), lambda dj, ni: (ni, dj))
        dims = ("parallel", "parallel")

    # Generation-aware VMEM budget: ~55% of physical on 64 MiB parts (v7x),
    # ~70% on 128 MiB parts (v5e/v6e).  Tiles above are sized so that even
    # double-buffered streams + temporaries stay well under the tighter cap.
    cap = _vmem_capacity_bytes()
    frac = 0.55 if cap <= (64 << 20) else 0.70
    vmem_limit = max(int(cap * frac), 24 << 20)

    cost = pl.CostEstimate(
        flops=2 * n_pad * d_pad,
        transcendentals=0,
        bytes_accessed=4 * (2 * n_pad * d_pad + n_pad + 2 * c * d_pad),
    )

    out = pl.pallas_call(
        kernel,
        out_shape=jax.ShapeDtypeStruct((n_pad, d_pad), jnp.float32),
        grid_spec=pltpu.PrefetchScalarGridSpec(
            num_scalar_prefetch=0,
            grid=grid,
            in_specs=in_specs,
            out_specs=out_spec,
        ),
        compiler_params=pltpu.CompilerParams(
            dimension_semantics=dims,
            vmem_limit_bytes=int(vmem_limit),
        ),
        cost_estimate=cost,
    )(x, y, a, b)

    return out[:n, :d]


# ----------------------------------------------------------------------------
# Module port
# ----------------------------------------------------------------------------
class OriginalBaryPallas:
    """JAX/Pallas port of OriginalBary(bary_type='gb') forward pass."""

    def __init__(self, n_classes, n_features, key):
        # Deterministic synthetic "fitted" parameters (stand-in for .fit()).
        k_mu, k_sig, k_w = jax.random.split(key, 3)
        self.mu = jax.random.normal(k_mu, (n_classes, n_features), jnp.float32)
        sigma = 0.5 + jax.nn.softplus(
            jax.random.normal(k_sig, (n_classes, n_features), jnp.float32))
        self.sigma = jnp.maximum(sigma, 1e-6)   # floor: real fitted sigmas may be tiny
        w = jax.nn.softmax(jax.random.normal(k_w, (n_classes,), jnp.float32))
        self.weights = w
        # 1-D Wasserstein barycenter of Gaussians: weighted mean of means/stds.
        self.mu_bar = (w[:, None] * self.mu).sum(0, keepdims=True)        # (1, D)
        self.sigma_bar = (w[:, None] * self.sigma).sum(0, keepdims=True)  # (1, D)
        # One-time fold into a per-class affine:  Z = A[y] + B[y] * X.
        self.B = self.sigma_bar / self.sigma                              # (C, D)
        self.A = self.mu_bar - self.B * self.mu                           # (C, D)

    def forward(self, x, y):
        return gaussian_bary_affine_transform(x, y, self.A, self.B)

    def reference(self, x, y):
        """Pure-JAX reference implementing the original (unfused) formula."""
        mu_y = self.mu[y]
        sig_y = self.sigma[y]
        return self.mu_bar + self.sigma_bar * (x - mu_y) / sig_y


# TODO(synk): bary_type in {'nb', 'gbnb', 'tree'} (empirical-CDF / decision-tree
# destructors) rely on data-dependent sorting / sklearn tree inference with no
# clean Pallas equivalent; only the Gaussian barycenter ('gb') path is ported.
# TODO(synk): optional bf16 streaming of X/Z (2x HBM saving) left out to keep
# exact f32 parity with the PyTorch reference.


if __name__ == "__main__":
    key = jax.random.PRNGKey(0)

    # --- Test 1: lane-dense D, small C (MXU one-hot gather on v6e/v7x).
    N, D, C = 256, 128, 4
    k_x, k_y, k_p, key = jax.random.split(key, 4)
    x = jax.random.normal(k_x, (N, D), jnp.float32)
    y = jax.random.randint(k_y, (N,), 0, C, jnp.int32)
    model = OriginalBaryPallas(C, D, k_p)
    z = jax.block_until_ready(model.forward(x, y))
    z_ref = model.reference(x, y)
    np.testing.assert_allclose(np.asarray(z), np.asarray(z_ref),
                               rtol=1e-4, atol=1e-5)

    # --- Test 2: ragged N and non-128 D (row + column padding, select gather).
    N2, D2, C2 = 37, 16, 3
    k_x2, k_y2, k_p2, key = jax.random.split(key, 4)
    x2 = jax.random.normal(k_x2, (N2, D2), jnp.float32)
    y2 = jax.random.randint(k_y2, (N2,), 0, C2, jnp.int32)
    model2 = OriginalBaryPallas(C2, D2, k_p2)
    z2 = jax.block_until_ready(model2.forward(x2, y2))
    z2_ref = model2.reference(x2, y2)
    np.testing.assert_allclose(np.asarray(z2), np.asarray(z2_ref),
                               rtol=1e-4, atol=1e-5)

    # --- Test 3: wide odd D -> D padded, multi-tile D axis (D outer, N inner).
    N3, D3, C3 = 64, 2200, 5
    k_x3, k_y3, k_p3, key = jax.random.split(key, 4)
    x3 = jax.random.normal(k_x3, (N3, D3), jnp.float32)
    y3 = jax.random.randint(k_y3, (N3,), 0, C3, jnp.int32)
    model3 = OriginalBaryPallas(C3, D3, k_p3)
    z3 = jax.block_until_ready(model3.forward(x3, y3))
    z3_ref = model3.reference(x3, y3)
    np.testing.assert_allclose(np.asarray(z3), np.asarray(z3_ref),
                               rtol=1e-4, atol=1e-5)

    print("KERNEL_OK")
</pallas_src>

<mosaic_0001>
module attributes {stable_mosaic.version = 11 : i64} {
  func.func @_bary_affine_kernel(%arg0: i32, %arg1: memref<128x128xf32, #tpu.memory_space<vmem>>, %arg2: memref<128x1xi32, #tpu.memory_space<vmem>>, %arg3: memref<4x128xf32, #tpu.memory_space<vmem>>, %arg4: memref<4x128xf32, #tpu.memory_space<vmem>>, %arg5: memref<128x128xf32, #tpu.memory_space<vmem>>) attributes {dimension_semantics = [#tpu.dimension_semantics<parallel>], iteration_bounds = array<i64: 2>, scalar_prefetch = 0 : i64, scratch_operands = 0 : i64, tpu.core_type = #tpu.core_type<tc>, window_params = [{transform_indices = @transform_0, window_bounds = array<i64: 128, 128>}, {transform_indices = @transform_1, window_bounds = array<i64: 128, 1>}, {pipeline_mode = #tpu.pipeline_mode<synchronous>, transform_indices = @transform_2, window_bounds = array<i64: 4, 128>}, {pipeline_mode = #tpu.pipeline_mode<synchronous>, transform_indices = @transform_3, window_bounds = array<i64: 4, 128>}, {transform_indices = @transform_4, window_bounds = array<i64: 128, 128>}]} {
    %c0 = arith.constant 0 : index
    %c0_0 = arith.constant 0 : index
    %0 = vector.load %arg1[%c0, %c0_0] : memref<128x128xf32, #tpu.memory_space<vmem>>, vector<128x128xf32>
    %c0_1 = arith.constant 0 : index
    %c0_2 = arith.constant 0 : index
    %1 = vector.load %arg2[%c0_1, %c0_2] : memref<128x1xi32, #tpu.memory_space<vmem>>, vector<128x1xi32>
    %c0_3 = arith.constant 0 : index
    %c0_4 = arith.constant 0 : index
    %2 = vector.load %arg3[%c0_3, %c0_4] : memref<4x128xf32, #tpu.memory_space<vmem>>, vector<4x128xf32>
    %c0_5 = arith.constant 0 : index
    %c0_6 = arith.constant 0 : index
    %3 = vector.load %arg4[%c0_5, %c0_6] : memref<4x128xf32, #tpu.memory_space<vmem>>, vector<4x128xf32>
    %4 = tpu.iota {dimensions = array<i32: 1>} : vector<128x4xi32>
    %5 = vector.broadcast %1 : vector<128x1xi32> to vector<128x4xi32>
    %6 = arith.cmpi eq, %5, %4 : vector<128x4xi32>
    %7 = arith.extui %6 : vector<128x4xi1> to vector<128x4xi32>
    %8 = arith.sitofp %7 : vector<128x4xi32> to vector<128x4xf32>
    %cst = arith.constant dense<0.000000e+00> : vector<128x128xf32>
    %9 = tpu.matmul %8, %2, %cst {dimension_numbers = #tpu.dot_dimension_numbers<[1], [0], [0], [1], [0, 0, 1, 1], [], []>} : vector<128x4xf32>, vector<4x128xf32>, vector<128x128xf32> -> vector<128x128xf32>
    %cst_7 = arith.constant dense<0.000000e+00> : vector<128x128xf32>
    %10 = tpu.matmul %8, %3, %cst_7 {dimension_numbers = #tpu.dot_dimension_numbers<[1], [0], [0], [1], [0, 0, 1, 1], [], []>} : vector<128x4xf32>, vector<4x128xf32>, vector<128x128xf32> -> vector<128x128xf32>
    %11 = arith.mulf %10, %0 : vector<128x128xf32>
    %12 = arith.addf %9, %11 : vector<128x128xf32>
    %c0_8 = arith.constant 0 : index
    %c0_9 = arith.constant 0 : index
    %13 = vector.load %arg5[%c0_8, %c0_9] : memref<128x128xf32, #tpu.memory_space<vmem>>, vector<128x128xf32>
    tpu.vector_store %arg5[%c0_8, %c0_9], %12 {strides = array<i32>} : memref<128x128xf32, #tpu.memory_space<vmem>>, vector<128x128xf32>,
    return
  }
  func.func @transform_0(%arg0: i32) -> (i32, i32) {
    %c0_i32 = arith.constant 0 : i32
    %c0_i32_0 = arith.constant 0 : i32
    return %arg0, %c0_i32 : i32, i32
  }
  func.func @transform_1(%arg0: i32) -> (i32, i32) {
    %c0_i32 = arith.constant 0 : i32
    %c0_i32_0 = arith.constant 0 : i32
    return %arg0, %c0_i32 : i32, i32
  }
  func.func @transform_2(%arg0: i32) -> (i32, i32) {
    %c0_i32 = arith.constant 0 : i32
    %c0_i32_0 = arith.constant 0 : i32
    %c0_i32_1 = arith.constant 0 : i32
    return %c0_i32, %c0_i32_0 : i32, i32
  }
  func.func @transform_3(%arg0: i32) -> (i32, i32) {
    %c0_i32 = arith.constant 0 : i32
    %c0_i32_0 = arith.constant 0 : i32
    %c0_i32_1 = arith.constant 0 : i32
    return %c0_i32, %c0_i32_0 : i32, i32
  }
  func.func @transform_4(%arg0: i32) -> (i32, i32) {
    %c0_i32 = arith.constant 0 : i32
    %c0_i32_0 = arith.constant 0 : i32
    return %arg0, %c0_i32 : i32, i32
  }
}

</mosaic_0001>

<llo_original>
// kernel: gaussian_bary_affine_transform.1
$region0: #{gaussian_bary_affine_transform.1}
  #allocation0 [shape = 'u32[]', space=smem, size = 0x4, offset = 0x4, fixed_abs, tag = 'smem constant byte address 0x4 - core index']
  #allocation1 [shape = 'u32[144,128]{1,0:T(1,128)}', space=vmem, size = 0x12000, scoped, tag = 'internal scratch']
  %s0 = inlined_call_operand.vmem [shape: f32[256,128], index: 0, kind: input, shape index: {}]
  %s1 = inlined_call_operand.vmem [shape: s32[256,1], index: 1, kind: input, shape index: {}]
  %s2 = inlined_call_operand.vmem [shape: f32[4,128], index: 2, kind: input, shape index: {}]
  %s3 = inlined_call_operand.vmem [shape: f32[4,128], index: 3, kind: input, shape index: {}]
  %s4 = inlined_call_operand.hbm [shape: f32[256,128], index: 4, kind: output, shape index: {}]
  %s5 = sld [smem:[#allocation0]]
  $region49: #{gaussian_bary_affine_transform.1} parent=0
    _
  %s7 = ssub.s32 1, %s5
  %s8 = scalar_select 0, %s7, %s5
  $region1: #{gaussian_bary_affine_transform.1} parent=0
    #allocation2 [shape = 'u8[131072]{0}', space=vmem, size = 0x20000, scoped, tag = 'output window, operand 0']
    #allocation3 [shape = 's32[2]{0}', space=sflag, size = 0x8, scoped, tag = 'scoped memory for gaussian_bary_affine_transform.1']
    %9 = vsyncpa [#allocation3], 0
    %s10 = scalar_lea.sflag [#allocation3], 1
    %11 = vsyncpa %s10, 0
    loop: start=0, step=1, limit=4
    $region2: #{gaussian_bary_affine_transform.1} parent=1 // loop_pre_header
      _
    $region3: #{gaussian_bary_affine_transform.1} parent=1 // loop_header
      %s13 = sphi 0, %s17
      %p14 = scmp.ge.s32.totalorder %s13, 4
      %s23 = sphi 0, %s25
      %s26 = sphi 0, %s23
      %s27 = sphi 0, %s26
      %s43 = sphi 0, %s27
      %s49 = sphi 0, %s51
      %s52 = sphi 0, %s49
      %s53 = sphi 0, %s52
      %s69 = sphi 0, %s53
      %s73 = sphi 0, %s73
      %s75 = sphi 0, %s73
      %s76 = sphi 0, %s75
      %s90 = sphi 0, %s76
      %s94 = sphi 0, %s94
      %s96 = sphi 0, %s94
      %s97 = sphi 0, %s96
      %s111 = sphi 0, %s97
      %s117 = sphi 0, %s119
      %s120 = sphi 0, %s117
      %s121 = sphi 0, %s120
      %s137 = sphi 0, %s121
    $region4: #{gaussian_bary_affine_transform.1} parent=1 // loop_header_branch
      %16 = sbr.rel (%p14) target = $region8
    $region5: #{gaussian_bary_affine_transform.1} parent=1 // loop_body
      %s18 = ssub.s32 %s13, 1
      %s19 = ssub.s32 %s13, 2
      %s20 = sadd.s32 %s13, 1
      %s21 = ssub.s32 %s13, %s20
      %p22 = scmp.eq.s32.totalorder %s21, 0
      %s24 = sadd.s32 %s23, 1
      %s25 = scalar_select %p22, %s23, %s24
      %p28 = pneg %p22
      %p29 = scmp.eq.s32.totalorder %s13, 1
      %p30 = por %p28, %p29
      %p31 = scmp.ne.s32.totalorder %s23, %s26
      %p32 = scmp.eq.s32.totalorder %s13, 0
      %p33 = por %p31, %p32
      %p34 = scmp.ne.s32.totalorder %s23, %s26
      %p35 = scmp.eq.s32.totalorder %s18, 1
      %p36 = por %p34, %p35
      %p37 = scmp.ne.s32.totalorder %s26, %s27
      %p38 = scmp.eq.s32.totalorder %s18, 0
      %p39 = por %p37, %p38
      %p40 = scmp.ne.s32.totalorder %s26, %s27
      %p41 = scmp.eq.s32.totalorder %s19, 1
      %p42 = por %p40, %p41
      %p44 = scmp.ne.s32.totalorder %s27, %s43
      %p45 = scmp.eq.s32.totalorder %s19, 0
      %p46 = por %p44, %p45
      %s47 = ssub.s32 %s13, %s20
      %p48 = scmp.eq.s32.totalorder %s47, 0
      %s50 = sadd.s32 %s49, 1
      %s51 = scalar_select %p48, %s49, %s50
      %p54 = pneg %p48
      %p55 = scmp.eq.s32.totalorder %s13, 1
      %p56 = por %p54, %p55
      %p57 = scmp.ne.s32.totalorder %s49, %s52
      %p58 = scmp.eq.s32.totalorder %s13, 0
      %p59 = por %p57, %p58
      %p60 = scmp.ne.s32.totalorder %s49, %s52
      %p61 = scmp.eq.s32.totalorder %s18, 1
      %p62 = por %p60, %p61
      %p63 = scmp.ne.s32.totalorder %s52, %s53
      %p64 = scmp.eq.s32.totalorder %s18, 0
      %p65 = por %p63, %p64
      %p66 = scmp.ne.s32.totalorder %s52, %s53
      %p67 = scmp.eq.s32.totalorder %s19, 1
      %p68 = por %p66, %p67
      %p70 = scmp.ne.s32.totalorder %s53, %s69
      %p71 = scmp.eq.s32.totalorder %s19, 0
      %p72 = por %p70, %p71
      %s74 = sadd.s32 %s73, 1
      %p77 = scmp.eq.s32.totalorder %s13, 1
      %p78 = scmp.ne.s32.totalorder %s73, %s75
      %p79 = scmp.eq.s32.totalorder %s13, 0
      %p80 = por %p78, %p79
      %p81 = scmp.ne.s32.totalorder %s73, %s75
      %p82 = scmp.eq.s32.totalorder %s18, 1
      %p83 = por %p81, %p82
      %p84 = scmp.ne.s32.totalorder %s75, %s76
      %p85 = scmp.eq.s32.totalorder %s18, 0
      %p86 = por %p84, %p85
      %p87 = scmp.ne.s32.totalorder %s75, %s76
      %p88 = scmp.eq.s32.totalorder %s19, 1
      %p89 = por %p87, %p88
      %p91 = scmp.ne.s32.totalorder %s76, %s90
      %p92 = scmp.eq.s32.totalorder %s19, 0
      %p93 = por %p91, %p92
      %s95 = sadd.s32 %s94, 1
      %p98 = scmp.eq.s32.totalorder %s13, 1
      %p99 = scmp.ne.s32.totalorder %s94, %s96
      %p100 = scmp.eq.s32.totalorder %s13, 0
      %p101 = por %p99, %p100
      %p102 = scmp.ne.s32.totalorder %s94, %s96
      %p103 = scmp.eq.s32.totalorder %s18, 1
      %p104 = por %p102, %p103
      %p105 = scmp.ne.s32.totalorder %s96, %s97
      %p106 = scmp.eq.s32.totalorder %s18, 0
      %p107 = por %p105, %p106
      %p108 = scmp.ne.s32.totalorder %s96, %s97
      %p109 = scmp.eq.s32.totalorder %s19, 1
      %p110 = por %p108, %p109
      %p112 = scmp.ne.s32.totalorder %s97, %s111
      %p113 = scmp.eq.s32.totalorder %s19, 0
      %p114 = por %p112, %p113
      %s115 = ssub.s32 %s13, %s20
      %p116 = scmp.eq.s32.totalorder %s115, 0
      %s118 = sadd.s32 %s117, 1
      %s119 = scalar_select %p116, %s117, %s118
      %p122 = pneg %p116
      %p123 = scmp.eq.s32.totalorder %s13, 1
      %p124 = por %p122, %p123
      %p125 = scmp.ne.s32.totalorder %s117, %s120
      %p126 = scmp.eq.s32.totalorder %s13, 0
      %p127 = por %p125, %p126
      %p128 = scmp.ne.s32.totalorder %s117, %s120
      %p129 = scmp.eq.s32.totalorder %s18, 1
      %p130 = por %p128, %p129
      %p131 = scmp.ne.s32.totalorder %s120, %s121
      %p132 = scmp.eq.s32.totalorder %s18, 0
      %p133 = por %p131, %p132
      %p134 = scmp.ne.s32.totalorder %s120, %s121
      %p135 = scmp.eq.s32.totalorder %s19, 1
      %p136 = por %p134, %p135
      %p138 = scmp.ne.s32.totalorder %s121, %s137
      %p139 = scmp.eq.s32.totalorder %s19, 0
      %p140 = por %p138, %p139
      %p141 = scmp.le.s32.totalorder 1, %s13
      %p142 = scmp.lt.s32.totalorder %s13, 3
      %p143 = pnand %p141, %p142
      %p144 = pneg %p143
      // Predicated region
      $region9: #{gaussian_bary_affine_transform.1} parent=5 // pred_check
        _
      $region10: #{gaussian_bary_affine_transform.1} parent=5 // pred_check_branch
        %146 = sbr.rel (%p143) target = $region12
      $region11: #{gaussian_bary_affine_transform.1} parent=5 // pred_region
        %s147 = ssub.s32 %s13, 1
        // Predicated region
        $region13: #{gaussian_bary_affine_transform.1} parent=11 // pred_check
          %p148 = pneg %p86
        $region14: #{gaussian_bary_affine_transform.1} parent=11 // pred_check_branch
          %150 = sbr.rel (%p148) target = $region16
        $region15: #{gaussian_bary_affine_transform.1} parent=11 // pred_region
          _
        $region16: #{gaussian_bary_affine_transform.1} parent=11 // pred_fallthru
          _
        // Predicated region
        $region17: #{gaussian_bary_affine_transform.1} parent=11 // pred_check
          %p151 = pneg %p107
        $region18: #{gaussian_bary_affine_transform.1} parent=11 // pred_check_branch
          %153 = sbr.rel (%p151) target = $region20
        $region19: #{gaussian_bary_affine_transform.1} parent=11 // pred_region
          _
        $region20: #{gaussian_bary_affine_transform.1} parent=11 // pred_fallthru
          _
      $region12: #{gaussian_bary_affine_transform.1} parent=5 // pred_fallthru
        _
      %p154 = scmp.lt.s32.totalorder %s13, 2
      // Predicated region
      $region21: #{gaussian_bary_affine_transform.1} parent=5 // pred_check
        %p155 = pneg %p154
      $region22: #{gaussian_bary_affine_transform.1} parent=5 // pred_check_branch
        %157 = sbr.rel (%p155) target = $region24
      $region23: #{gaussian_bary_affine_transform.1} parent=5 // pred_region
        // Predicated region
        $region25: #{gaussian_bary_affine_transform.1} parent=23 // pred_check
          %p158 = pneg %p33
        $region26: #{gaussian_bary_affine_transform.1} parent=23 // pred_check_branch
          %160 = sbr.rel (%p158) target = $region28
        $region27: #{gaussian_bary_affine_transform.1} parent=23 // pred_region
          %s161 = smul.u32 16, %s13
          %p162 = scmp.lt.s32.totalorder %s161, 31
          %s163 = scalar_select %p162, %s161, 31
          %s164 = smul.addr %s163, 8
          %s165 = scalar_lea.vmem %s0, %s164
          %s166 = smul.u32 16, %s13
        $region28: #{gaussian_bary_affine_transform.1} parent=23 // pred_fallthru
          _
        // Predicated region
        $region29: #{gaussian_bary_affine_transform.1} parent=23 // pred_check
          %p167 = pneg %p59
        $region30: #{gaussian_bary_affine_transform.1} parent=23 // pred_check_branch
          %169 = sbr.rel (%p167) target = $region32
        $region31: #{gaussian_bary_affine_transform.1} parent=23 // pred_region
          %s170 = smul.u32 16, %s13
          %p171 = scmp.lt.s32.totalorder %s170, 31
          %s172 = scalar_select %p171, %s170, 31
          %s173 = smul.addr %s172, 8
          %s174 = scalar_lea.vmem %s1, %s173
          %s175 = smul.u32 16, %s13
        $region32: #{gaussian_bary_affine_transform.1} parent=23 // pred_fallthru
          _
      $region24: #{gaussian_bary_affine_transform.1} parent=5 // pred_fallthru
        _
      %p176 = scmp.le.s32.totalorder 1, %s13
      %p177 = scmp.lt.s32.totalorder %s13, 3
      %p178 = pnand %p176, %p177
      %p179 = pneg %p178
      // Predicated region
      $region33: #{gaussian_bary_affine_transform.1} parent=5 // pred_check
        _
      $region34: #{gaussian_bary_affine_transform.1} parent=5 // pred_check_branch
        %181 = sbr.rel (%p178) target = $region36
      $region35: #{gaussian_bary_affine_transform.1} parent=5 // pred_region
        %s182 = ssub.s32 %s13, 1
        %s183 = smul.u32 16, %s18
        %p184 = scmp.lt.s32.totalorder %s183, 31
        %s185 = scalar_select %p184, %s183, 31
        %s186 = smul.addr %s185, 8
        %s187 = scalar_lea.vmem %s0, %s186
        %p188 = pneg %p39
        %p189 = pneg %p36
        %s190 = smul.u32 16, %s18
        %p191 = scmp.lt.s32.totalorder %s190, 31
        %s192 = scalar_select %p191, %s190, 31
        %s193 = smul.addr %s192, 8
        %s194 = scalar_lea.vmem %s1, %s193
        %p195 = pneg %p65
        %p196 = pneg %p62
        %p197 = pneg %p86
        %p198 = pneg %p83
        %p199 = pneg %p107
        %p200 = pneg %p104
        %p201 = pneg %p133
        %p202 = pneg %p130
        %s203 = sand.u32 %s120, 1
        %s204 = scalar_lea.sflag [#allocation3], %s203
        %s205 = sand.u32 %s120, 1
        %s206 = smul.addr %s205, 128
        %s207 = scalar_lea.vmem [#allocation2], %s206
        %s208 = smul.u32 16, %s18
        %p209 = scmp.lt.s32.totalorder %s208, 31
        %s210 = scalar_select %p209, %s208, 31
        %s211 = smul.addr %s210, 8
        %s212 = scalar_lea.vmem %s0, %s211
        %s213 = smul.u32 16, %s18
        %s214 = smul.u32 16, %s18
        %p215 = scmp.lt.s32.totalorder %s214, 31
        %s216 = scalar_select %p215, %s214, 31
        %s217 = smul.addr %s216, 8
        %s218 = scalar_lea.vmem %s1, %s217
        %s219 = smul.u32 16, %s18
        %s220 = smul.u32 16, %s18
        %v221 = vld [vmem:[%s212] sm:$0xff]
        %v222 = vld [vmem:[%s212 + $0x8] sm:$0xff]
        %v223 = vld [vmem:[%s212 + $0x10] sm:$0xff]
        %v224 = vld [vmem:[%s212 + $0x18] sm:$0xff]
        %v225 = vld [vmem:[%s212 + $0x20] sm:$0xff]
        %v226 = vld [vmem:[%s212 + $0x28] sm:$0xff]
        %v227 = vld [vmem:[%s212 + $0x30] sm:$0xff]
        %v228 = vld [vmem:[%s212 + $0x38] sm:$0xff]
        %v229 = vld [vmem:[%s212 + $0x40] sm:$0xff]
        %v230 = vld [vmem:[%s212 + $0x48] sm:$0xff]
        %v231 = vld [vmem:[%s212 + $0x50] sm:$0xff]
        %v232 = vld [vmem:[%s212 + $0x58] sm:$0xff]
        %v233 = vld [vmem:[%s212 + $0x60] sm:$0xff]
        %v234 = vld [vmem:[%s212 + $0x68] sm:$0xff]
        %v235 = vld [vmem:[%s212 + $0x70] sm:$0xff]
        %v236 = vld [vmem:[%s212 + $0x78] sm:$0xff]
        %v237 = vld [vmem:[%s218] sm:$0xff]
        %v238 = vld [vmem:[%s218 + $0x8] sm:$0xff]
        %v239 = vld [vmem:[%s218 + $0x10] sm:$0xff]
        %v240 = vld [vmem:[%s218 + $0x18] sm:$0xff]
        %v241 = vld [vmem:[%s218 + $0x20] sm:$0xff]
        %v242 = vld [vmem:[%s218 + $0x28] sm:$0xff]
        %v243 = vld [vmem:[%s218 + $0x30] sm:$0xff]
        %v244 = vld [vmem:[%s218 + $0x38] sm:$0xff]
        %v245 = vld [vmem:[%s218 + $0x40] sm:$0xff]
        %v246 = vld [vmem:[%s218 + $0x48] sm:$0xff]
        %v247 = vld [vmem:[%s218 + $0x50] sm:$0xff]
        %v248 = vld [vmem:[%s218 + $0x58] sm:$0xff]
        %v249 = vld [vmem:[%s218 + $0x60] sm:$0xff]
        %v250 = vld [vmem:[%s218 + $0x68] sm:$0xff]
        %v251 = vld [vmem:[%s218 + $0x70] sm:$0xff]
        %v252 = vld [vmem:[%s218 + $0x78] sm:$0xff]
        %v253 = vld [vmem:[%s2] sm:$0xf]
        %v254 = vld [vmem:[%s3] sm:$0xf]
        %v255 = vlaneseq
        %v256 = vand.u32 %v255, 127
        %257 = vset.pattern.permute.xlu0 0
        %258 = vperm.xlu0 %257, %v237
        %v259 = vpop.permute.xlu0 %258
        %260 = vset.pattern.permute.xlu0 0
        %261 = vperm.xlu0 %260, %v238
        %v262 = vpop.permute.xlu0 %261
        %263 = vset.pattern.permute.xlu0 0
        %264 = vperm.xlu0 %263, %v239
        %v265 = vpop.permute.xlu0 %264
        %266 = vset.pattern.permute.xlu0 0
        %267 = vperm.xlu0 %266, %v240
        %v268 = vpop.permute.xlu0 %267
        %269 = vset.pattern.permute.xlu0 0
        %270 = vperm.xlu0 %269, %v241
        %v271 = vpop.permute.xlu0 %270
        %272 = vset.pattern.permute.xlu0 0
        %273 = vperm.xlu0 %272, %v242
        %v274 = vpop.permute.xlu0 %273
        %275 = vset.pattern.permute.xlu0 0
        %276 = vperm.xlu0 %275, %v243
        %v277 = vpop.permute.xlu0 %276
        %278 = vset.pattern.permute.xlu0 0
        %279 = vperm.xlu0 %278, %v244
        %v280 = vpop.permute.xlu0 %279
        %281 = vset.pattern.permute.xlu0 0
        %282 = vperm.xlu0 %281, %v245
        %v283 = vpop.permute.xlu0 %282
        %284 = vset.pattern.permute.xlu0 0
        %285 = vperm.xlu0 %284, %v246
        %v286 = vpop.permute.xlu0 %285
        %287 = vset.pattern.permute.xlu0 0
        %288 = vperm.xlu0 %287, %v247
        %v289 = vpop.permute.xlu0 %288
        %290 = vset.pattern.permute.xlu0 0
        %291 = vperm.xlu0 %290, %v248
        %v292 = vpop.permute.xlu0 %291
        %293 = vset.pattern.permute.xlu0 0
        %294 = vperm.xlu0 %293, %v249
        %v295 = vpop.permute.xlu0 %294
        %296 = vset.pattern.permute.xlu0 0
        %297 = vperm.xlu0 %296, %v250
        %v298 = vpop.permute.xlu0 %297
        %299 = vset.pattern.permute.xlu0 0
        %300 = vperm.xlu0 %299, %v251
        %v301 = vpop.permute.xlu0 %300
        %302 = vset.pattern.permute.xlu0 0
        %303 = vperm.xlu0 %302, %v252
        %v304 = vpop.permute.xlu0 %303
        %vm305 = vcmp.eq.s32.totalorder %v259, %v256
        %vm306 = vcmp.eq.s32.totalorder %v262, %v256
        %vm307 = vcmp.eq.s32.totalorder %v265, %v256
        %vm308 = vcmp.eq.s32.totalorder %v268, %v256
        %vm309 = vcmp.eq.s32.totalorder %v271, %v256
        %vm310 = vcmp.eq.s32.totalorder %v274, %v256
        %vm311 = vcmp.eq.s32.totalorder %v277, %v256
        %vm312 = vcmp.eq.s32.totalorder %v280, %v256
        %vm313 = vcmp.eq.s32.totalorder %v283, %v256
        %vm314 = vcmp.eq.s32.totalorder %v286, %v256
        %vm315 = vcmp.eq.s32.totalorder %v289, %v256
        %vm316 = vcmp.eq.s32.totalorder %v292, %v256
        %vm317 = vcmp.eq.s32.totalorder %v295, %v256
        %vm318 = vcmp.eq.s32.totalorder %v298, %v256
        %vm319 = vcmp.eq.s32.totalorder %v301, %v256
        %vm320 = vcmp.eq.s32.totalorder %v304, %v256
        %v321 = vsel %vm305, 1, 0
        %v322 = vsel %vm306, 1, 0
        %v323 = vsel %vm307, 1, 0
        %v324 = vsel %vm308, 1, 0
        %v325 = vsel %vm309, 1, 0
        %v326 = vsel %vm310, 1, 0
        %v327 = vsel %vm311, 1, 0
        %v328 = vsel %vm312, 1, 0
        %v329 = vsel %vm313, 1, 0
        %v330 = vsel %vm314, 1, 0
        %v331 = vsel %vm315, 1, 0
        %v332 = vsel %vm316, 1, 0
        %v333 = vsel %vm317, 1, 0
        %v334 = vsel %vm318, 1, 0
        %v335 = vsel %vm319, 1, 0
        %v336 = vsel %vm320, 1, 0
        %v337 = vcvt.s32.f32 %v321
        %v338 = vcvt.s32.f32 %v322
        %v339 = vcvt.s32.f32 %v323
        %v340 = vcvt.s32.f32 %v324
        %v341 = vcvt.s32.f32 %v325
        %v342 = vcvt.s32.f32 %v326
        %v343 = vcvt.s32.f32 %v327
        %v344 = vcvt.s32.f32 %v328
        %v345 = vcvt.s32.f32 %v329
        %v346 = vcvt.s32.f32 %v330
        %v347 = vcvt.s32.f32 %v331
        %v348 = vcvt.s32.f32 %v332
        %v349 = vcvt.s32.f32 %v333
        %v350 = vcvt.s32.f32 %v334
        %v351 = vcvt.s32.f32 %v335
        %v352 = vcvt.s32.f32 %v336
        %vm353 = vcmask 31744
        %v355 = vsel %vm353, %v337, 0
        %v358 = vsel %vm353, %v338, 0
        %v361 = vsel %vm353, %v339, 0
        %v364 = vsel %vm353, %v340, 0
        %v367 = vsel %vm353, %v341, 0
        %v370 = vsel %vm353, %v342, 0
        %v373 = vsel %vm353, %v343, 0
        %v376 = vsel %vm353, %v344, 0
        %v379 = vsel %vm353, %v345, 0
        %v382 = vsel %vm353, %v346, 0
        %v385 = vsel %vm353, %v347, 0
        %v388 = vsel %vm353, %v348, 0
        %v391 = vsel %vm353, %v349, 0
        %v394 = vsel %vm353, %v350, 0
        %v397 = vsel %vm353, %v351, 0
        %v400 = vsel %vm353, %v352, 0
        %vm402 = vcmask 1043456
        %v404 = vsel %vm402, %v254, 0
        %406 = vmatprep.subr.mxu0 0.0
        %407 = vmatpush1.msra.mxu0 %v404
        %408 = vmatprep.subr.mxu0 0.0
        %409 = vmatpush1.msra.mxu0 0.0
        %410 = vmatprep.subr.mxu0 0.0
        %411 = vmatpush1.msra.mxu0 0.0
        %412 = vmatprep.subr.mxu0 0.0
        %413 = vmatpush1.msra.mxu0 0.0
        %414 = vmatprep.subr.mxu0 0.0
        %415 = vmatpush1.msra.mxu0 0.0
        %416 = vmatprep.subr.mxu0 0.0
        %417 = vmatpush1.msra.mxu0 0.0
        %418 = vmatprep.subr.mxu0 0.0
        %419 = vmatpush1.msra.mxu0 0.0
        %420 = vmatprep.subr.mxu0 0.0
        %421 = vmatpush1.msra.mxu0 0.0
        %422 = vmatprep.subr.mxu0 0.0
        %423 = vmatpush1.msra.mxu0 0.0
        %424 = vmatprep.subr.mxu0 0.0
        %425 = vmatpush1.msra.mxu0 0.0
        %426 = vmatprep.subr.mxu0 0.0
        %427 = vmatpush1.msra.mxu0 0.0
        %428 = vmatprep.subr.mxu0 0.0
        %429 = vmatpush1.msra.mxu0 0.0
        %430 = vmatprep.subr.mxu0 0.0
        %431 = vmatpush1.msra.mxu0 0.0
        %432 = vmatprep.subr.mxu0 0.0
        %433 = vmatpush1.msra.mxu0 0.0
        %434 = vmatprep.subr.mxu0 0.0
        %435 = vmatpush1.msra.mxu0 0.0
        %436 = vmatprep.subr.mxu0 0.0
        %437 = vmatpush1.msra.mxu0 0.0
        %438 = vmatprep.subr.mxu0 0.0
        %439 = vmatpush1.msra.mxu0 0.0
        %440 = vmatprep.subr.mxu0 0.0
        %441 = vmatpush1.msra.mxu0 0.0
        %442 = vmatprep.subr.mxu0 0.0
        %443 = vmatpush1.msra.mxu0 0.0
        %444 = vmatprep.subr.mxu0 0.0
        %445 = vmatpush1.msra.mxu0 0.0
        %446 = vmatprep.subr.mxu0 0.0
        %447 = vmatpush1.msra.mxu0 0.0
        %448 = vmatprep.subr.mxu0 0.0
        %449 = vmatpush1.msra.mxu0 0.0
        %450 = vmatprep.subr.mxu0 0.0
        %451 = vmatpush1.msra.mxu0 0.0
        %452 = vmatprep.subr.mxu0 0.0
        %453 = vmatpush1.msra.mxu0 0.0
        %454 = vmatprep.subr.mxu0 0.0
        %455 = vmatpush1.msra.mxu0 0.0
        %456 = vmatprep.subr.mxu0 0.0
        %457 = vmatpush1.msra.mxu0 0.0
        %458 = vmatprep.subr.mxu0 0.0
        %459 = vmatpush1.msra.mxu0 0.0
        %460 = vmatprep.subr.mxu0 0.0
        %461 = vmatpush1.msra.mxu0 0.0
        %462 = vmatprep.subr.mxu0 0.0
        %463 = vmatpush1.msra.mxu0 0.0
        %464 = vmatprep.subr.mxu0 0.0
        %465 = vmatpush1.msra.mxu0 0.0
        %466 = vmatprep.subr.mxu0 0.0
        %467 = vmatpush1.msra.mxu0 0.0
        %468 = vmatprep.subr.mxu0 0.0
        %469 = vmatpush1.msra.mxu0 0.0
        %470 = vmatprep.mubr.f32.mxu0 0.0
        %471 = vmatmul.mubr.f32.gmra.mrb[0].mxu0 %v355
        %v472 = vpop.f32.mrb[0].mxu0
        %v473 = vadd.f32 0.0, %v472
        %v474 = vpop.f32.mrb[0].mxu0
        %475 = vmatprep.mubr.f32.mxu0 0.0
        %476 = vmatmul.mubr.f32.gmra.mrb[0].mxu0 %v358
        %v477 = vpop.f32.mrb[0].mxu0
        %v478 = vadd.f32 0.0, %v477
        %v479 = vpop.f32.mrb[0].mxu0
        %480 = vmatprep.mubr.f32.mxu0 0.0
        %481 = vmatmul.mubr.f32.gmra.mrb[0].mxu0 %v361
        %v482 = vpop.f32.mrb[0].mxu0
        %v483 = vadd.f32 0.0, %v482
        %v484 = vpop.f32.mrb[0].mxu0
        %485 = vmatprep.mubr.f32.mxu0 0.0
        %486 = vmatmul.mubr.f32.gmra.mrb[0].mxu0 %v364
        %v487 = vpop.f32.mrb[0].mxu0
        %v488 = vadd.f32 0.0, %v487
        %v489 = vpop.f32.mrb[0].mxu0
        %490 = vmatprep.mubr.f32.mxu0 0.0
        %491 = vmatmul.mubr.f32.gmra.mrb[0].mxu0 %v367
        %v492 = vpop.f32.mrb[0].mxu0
        %v493 = vadd.f32 0.0, %v492
        %v494 = vpop.f32.mrb[0].mxu0
        %495 = vmatprep.mubr.f32.mxu0 0.0
        %496 = vmatmul.mubr.f32.gmra.mrb[0].mxu0 %v370
        %v497 = vpop.f32.mrb[0].mxu0
        %v498 = vadd.f32 0.0, %v497
        %v499 = vpop.f32.mrb[0].mxu0
        %500 = vmatprep.mubr.f32.mxu0 0.0
        %501 = vmatmul.mubr.f32.gmra.mrb[0].mxu0 %v373
        %v502 = vpop.f32.mrb[0].mxu0
        %v503 = vadd.f32 0.0, %v502
        %v504 = vpop.f32.mrb[0].mxu0
        %505 = vmatprep.mubr.f32.mxu0 0.0
        %506 = vmatmul.mubr.f32.gmra.mrb[0].mxu0 %v376
        %v507 = vpop.f32.mrb[0].mxu0
        %v508 = vadd.f32 0.0, %v507
        %v509 = vpop.f32.mrb[0].mxu0
        %510 = vmatprep.mubr.f32.mxu0 0.0
        %511 = vmatmul.mubr.f32.gmra.mrb[0].mxu0 %v379
        %v512 = vpop.f32.mrb[0].mxu0
        %v513 = vadd.f32 0.0, %v512
        %v514 = vpop.f32.mrb[0].mxu0
        %515 = vmatprep.mubr.f32.mxu0 0.0
        %516 = vmatmul.mubr.f32.gmra.mrb[0].mxu0 %v382
        %v517 = vpop.f32.mrb[0].mxu0
        %v518 = vadd.f32 0.0, %v517
        %v519 = vpop.f32.mrb[0].mxu0
        %520 = vmatprep.mubr.f32.mxu0 0.0
        %521 = vmatmul.mubr.f32.gmra.mrb[0].mxu0 %v385
        %v522 = vpop.f32.mrb[0].mxu0
        %v523 = vadd.f32 0.0, %v522
        %v524 = vpop.f32.mrb[0].mxu0
        %525 = vmatprep.mubr.f32.mxu0 0.0
        %526 = vmatmul.mubr.f32.gmra.mrb[0].mxu0 %v388
        %v527 = vpop.f32.mrb[0].mxu0
        %v528 = vadd.f32 0.0, %v527
        %v529 = vpop.f32.mrb[0].mxu0
        %530 = vmatprep.mubr.f32.mxu0 0.0
        %531 = vmatmul.mubr.f32.gmra.mrb[0].mxu0 %v391
        %v532 = vpop.f32.mrb[0].mxu0
        %v533 = vadd.f32 0.0, %v532
        %v534 = vpop.f32.mrb[0].mxu0
        %535 = vmatprep.mubr.f32.mxu0 0.0
        %536 = vmatmul.mubr.f32.gmra.mrb[0].mxu0 %v394
        %v537 = vpop.f32.mrb[0].mxu0
        %v538 = vadd.f32 0.0, %v537
        %v539 = vpop.f32.mrb[0].mxu0
        %540 = vmatprep.mubr.f32.mxu0 0.0
        %541 = vmatmul.mubr.f32.gmra.mrb[0].mxu0 %v397
        %v542 = vpop.f32.mrb[0].mxu0
        %v543 = vadd.f32 0.0, %v542
        %v544 = vpop.f32.mrb[0].mxu0
        %545 = vmatprep.mubr.f32.mxu0 0.0
        %546 = vmatmul.mubr.f32.gmra.mrb[0].mxu0 %v400
        %v547 = vpop.f32.mrb[0].mxu0
        %v548 = vadd.f32 0.0, %v547
        %v549 = vpop.f32.mrb[0].mxu0
        %550 = vdwg.mxu0
        %v551 = vmul.f32 %v473, %v221
        %v552 = vmul.f32 %v478, %v222
        %v553 = vmul.f32 %v483, %v223
        %v554 = vmul.f32 %v488, %v224
        %v555 = vmul.f32 %v493, %v225
        %v556 = vmul.f32 %v498, %v226
        %v557 = vmul.f32 %v503, %v227
        %v558 = vmul.f32 %v508, %v228
        %v559 = vmul.f32 %v513, %v229
        %v560 = vmul.f32 %v518, %v230
        %v561 = vmul.f32 %v523, %v231
        %v562 = vmul.f32 %v528, %v232
        %v563 = vmul.f32 %v533, %v233
        %v564 = vmul.f32 %v538, %v234
        %v565 = vmul.f32 %v543, %v235
        %v566 = vmul.f32 %v548, %v236
        %v568 = vsel %vm402, %v253, 0
        %570 = vmatprep.subr.mxu0 0.0
        %571 = vmatpush1.msra.mxu0 %v568
        %572 = vmatprep.subr.mxu0 0.0
        %573 = vmatpush1.msra.mxu0 0.0
        %574 = vmatprep.subr.mxu0 0.0
        %575 = vmatpush1.msra.mxu0 0.0
        %576 = vmatprep.subr.mxu0 0.0
        %577 = vmatpush1.msra.mxu0 0.0
        %578 = vmatprep.subr.mxu0 0.0
        %579 = vmatpush1.msra.mxu0 0.0
        %580 = vmatprep.subr.mxu0 0.0
        %581 = vmatpush1.msra.mxu0 0.0
        %582 = vmatprep.subr.mxu0 0.0
        %583 = vmatpush1.msra.mxu0 0.0
        %584 = vmatprep.subr.mxu0 0.0
        %585 = vmatpush1.msra.mxu0 0.0
        %586 = vmatprep.subr.mxu0 0.0
        %587 = vmatpush1.msra.mxu0 0.0
        %588 = vmatprep.subr.mxu0 0.0
        %589 = vmatpush1.msra.mxu0 0.0
        %590 = vmatprep.subr.mxu0 0.0
        %591 = vmatpush1.msra.mxu0 0.0
        %592 = vmatprep.subr.mxu0 0.0
        %593 = vmatpush1.msra.mxu0 0.0
        %594 = vmatprep.subr.mxu0 0.0
        %595 = vmatpush1.msra.mxu0 0.0
        %596 = vmatprep.subr.mxu0 0.0
        %597 = vmatpush1.msra.mxu0 0.0
        %598 = vmatprep.subr.mxu0 0.0
        %599 = vmatpush1.msra.mxu0 0.0
        %600 = vmatprep.subr.mxu0 0.0
        %601 = vmatpush1.msra.mxu0 0.0
        %602 = vmatprep.subr.mxu0 0.0
        %603 = vmatpush1.msra.mxu0 0.0
        %604 = vmatprep.subr.mxu0 0.0
        %605 = vmatpush1.msra.mxu0 0.0
        %606 = vmatprep.subr.mxu0 0.0
        %607 = vmatpush1.msra.mxu0 0.0
        %608 = vmatprep.subr.mxu0 0.0
        %609 = vmatpush1.msra.mxu0 0.0
        %610 = vmatprep.subr.mxu0 0.0
        %611 = vmatpush1.msra.mxu0 0.0
        %612 = vmatprep.subr.mxu0 0.0
        %613 = vmatpush1.msra.mxu0 0.0
        %614 = vmatprep.subr.mxu0 0.0
        %615 = vmatpush1.msra.mxu0 0.0
        %616 = vmatprep.subr.mxu0 0.0
        %617 = vmatpush1.msra.mxu0 0.0
        %618 = vmatprep.subr.mxu0 0.0
        %619 = vmatpush1.msra.mxu0 0.0
        %620 = vmatprep.subr.mxu0 0.0
        %621 = vmatpush1.msra.mxu0 0.0
        %622 = vmatprep.subr.mxu0 0.0
        %623 = vmatpush1.msra.mxu0 0.0
        %624 = vmatprep.subr.mxu0 0.0
        %625 = vmatpush1.msra.mxu0 0.0
        %626 = vmatprep.subr.mxu0 0.0
        %627 = vmatpush1.msra.mxu0 0.0
        %628 = vmatprep.subr.mxu0 0.0
        %629 = vmatpush1.msra.mxu0 0.0
        %630 = vmatprep.subr.mxu0 0.0
        %631 = vmatpush1.msra.mxu0 0.0
        %632 = vmatprep.subr.mxu0 0.0
        %633 = vmatpush1.msra.mxu0 0.0
        %634 = vmatprep.mubr.f32.mxu0 0.0
        %635 = vmatmul.mubr.f32.gmra.mrb[0].mxu0 %v355
        %v636 = vpop.f32.mrb[0].mxu0
        %v637 = vadd.f32 %v551, %v636
        %v638 = vpop.f32.mrb[0].mxu0
        %639 = vmatprep.mubr.f32.mxu0 0.0
        %640 = vmatmul.mubr.f32.gmra.mrb[0].mxu0 %v358
        %v641 = vpop.f32.mrb[0].mxu0
        %v642 = vadd.f32 %v552, %v641
        %v643 = vpop.f32.mrb[0].mxu0
        %644 = vmatprep.mubr.f32.mxu0 0.0
        %645 = vmatmul.mubr.f32.gmra.mrb[0].mxu0 %v361
        %v646 = vpop.f32.mrb[0].mxu0
        %v647 = vadd.f32 %v553, %v646
        %v648 = vpop.f32.mrb[0].mxu0
        %649 = vmatprep.mubr.f32.mxu0 0.0
        %650 = vmatmul.mubr.f32.gmra.mrb[0].mxu0 %v364
        %v651 = vpop.f32.mrb[0].mxu0
        %v652 = vadd.f32 %v554, %v651
        %v653 = vpop.f32.mrb[0].mxu0
        %654 = vmatprep.mubr.f32.mxu0 0.0
        %655 = vmatmul.mubr.f32.gmra.mrb[0].mxu0 %v367
        %v656 = vpop.f32.mrb[0].mxu0
        %v657 = vadd.f32 %v555, %v656
        %v658 = vpop.f32.mrb[0].mxu0
        %659 = vmatprep.mubr.f32.mxu0 0.0
        %660 = vmatmul.mubr.f32.gmra.mrb[0].mxu0 %v370
        %v661 = vpop.f32.mrb[0].mxu0
        %v662 = vadd.f32 %v556, %v661
        %v663 = vpop.f32.mrb[0].mxu0
        %664 = vmatprep.mubr.f32.mxu0 0.0
        %665 = vmatmul.mubr.f32.gmra.mrb[0].mxu0 %v373
        %v666 = vpop.f32.mrb[0].mxu0
        %v667 = vadd.f32 %v557, %v666
        %v668 = vpop.f32.mrb[0].mxu0
        %669 = vmatprep.mubr.f32.mxu0 0.0
        %670 = vmatmul.mubr.f32.gmra.mrb[0].mxu0 %v376
        %v671 = vpop.f32.mrb[0].mxu0
        %v672 = vadd.f32 %v558, %v671
        %v673 = vpop.f32.mrb[0].mxu0
        %674 = vmatprep.mubr.f32.mxu0 0.0
        %675 = vmatmul.mubr.f32.gmra.mrb[0].mxu0 %v379
        %v676 = vpop.f32.mrb[0].mxu0
        %v677 = vadd.f32 %v559, %v676
        %v678 = vpop.f32.mrb[0].mxu0
        %679 = vmatprep.mubr.f32.mxu0 0.0
        %680 = vmatmul.mubr.f32.gmra.mrb[0].mxu0 %v382
        %v681 = vpop.f32.mrb[0].mxu0
        %v682 = vadd.f32 %v560, %v681
        %v683 = vpop.f32.mrb[0].mxu0
        %684 = vmatprep.mubr.f32.mxu0 0.0
        %685 = vmatmul.mubr.f32.gmra.mrb[0].mxu0 %v385
        %v686 = vpop.f32.mrb[0].mxu0
        %v687 = vadd.f32 %v561, %v686
        %v688 = vpop.f32.mrb[0].mxu0
        %689 = vmatprep.mubr.f32.mxu0 0.0
        %690 = vmatmul.mubr.f32.gmra.mrb[0].mxu0 %v388
        %v691 = vpop.f32.mrb[0].mxu0
        %v692 = vadd.f32 %v562, %v691
        %v693 = vpop.f32.mrb[0].mxu0
        %694 = vmatprep.mubr.f32.mxu0 0.0
        %695 = vmatmul.mubr.f32.gmra.mrb[0].mxu0 %v391
        %v696 = vpop.f32.mrb[0].mxu0
        %v697 = vadd.f32 %v563, %v696
        %v698 = vpop.f32.mrb[0].mxu0
        %699 = vmatprep.mubr.f32.mxu0 0.0
        %700 = vmatmul.mubr.f32.gmra.mrb[0].mxu0 %v394
        %v701 = vpop.f32.mrb[0].mxu0
        %v702 = vadd.f32 %v564, %v701
        %v703 = vpop.f32.mrb[0].mxu0
        %704 = vmatprep.mubr.f32.mxu0 0.0
        %705 = vmatmul.mubr.f32.gmra.mrb[0].mxu0 %v397
        %v706 = vpop.f32.mrb[0].mxu0
        %v707 = vadd.f32 %v565, %v706
        %v708 = vpop.f32.mrb[0].mxu0
        %709 = vmatprep.mubr.f32.mxu0 0.0
        %710 = vmatmul.mubr.f32.gmra.mrb[0].mxu0 %v400
        %v711 = vpop.f32.mrb[0].mxu0
        %v712 = vadd.f32 %v566, %v711
        %v713 = vpop.f32.mrb[0].mxu0
        %714 = vdwg.mxu0
        %715 = vst [vmem:[%s207] sm:$0xff] %v637
        %716 = vst [vmem:[%s207 + $0x8] sm:$0xff] %v642
        %717 = vst [vmem:[%s207 + $0x10] sm:$0xff] %v647
        %718 = vst [vmem:[%s207 + $0x18] sm:$0xff] %v652
        %719 = vst [vmem:[%s207 + $0x20] sm:$0xff] %v657
        %720 = vst [vmem:[%s207 + $0x28] sm:$0xff] %v662
        %721 = vst [vmem:[%s207 + $0x30] sm:$0xff] %v667
        %722 = vst [vmem:[%s207 + $0x38] sm:$0xff] %v672
        %723 = vst [vmem:[%s207 + $0x40] sm:$0xff] %v677
        %724 = vst [vmem:[%s207 + $0x48] sm:$0xff] %v682
        %725 = vst [vmem:[%s207 + $0x50] sm:$0xff] %v687
        %726 = vst [vmem:[%s207 + $0x58] sm:$0xff] %v692
        %727 = vst [vmem:[%s207 + $0x60] sm:$0xff] %v697
        %728 = vst [vmem:[%s207 + $0x68] sm:$0xff] %v702
        %729 = vst [vmem:[%s207 + $0x70] sm:$0xff] %v707
        %730 = vst [vmem:[%s207 + $0x78] sm:$0xff] %v712
        %s731 = sand.u32 %s120, 1
        %s732 = scalar_lea.sflag [#allocation3], %s731
        %s733 = sand.u32 %s120, 1
        %s734 = smul.addr %s733, 128
        %s735 = scalar_lea.vmem [#allocation2], %s734
        // Predicated region
        $region37: #{gaussian_bary_affine_transform.1} parent=35 // pred_check
          %p736 = pneg %p130
        $region38: #{gaussian_bary_affine_transform.1} parent=35 // pred_check_branch
          %738 = sbr.rel (%p736) target = $region40
        $region39: #{gaussian_bary_affine_transform.1} parent=35 // pred_region
          %s739 = smul.u32 16, %s18
          %s741 = ssub.s32 2048, 2048
          %742 = vsyncadd %s732, %s741
          %s743 = smul.addr %s739, 128
          %s744 = scalar_lea.hbm %s4, %s743
          %s745 = sshll.u32 %s735, 4
          %s746 = int_to_ptr.vmem [resolvable:$true] %s745
          %751 = dma.vmem_to_hbm [thread:$0]  %s746, 2048, %s744, %s732, 128, 128, 8
        $region40: #{gaussian_bary_affine_transform.1} parent=35 // pred_fallthru
          _
      $region36: #{gaussian_bary_affine_transform.1} parent=5 // pred_fallthru
        _
      %p752 = scmp.le.s32.totalorder 2, %s13
      // Predicated region
      $region41: #{gaussian_bary_affine_transform.1} parent=5 // pred_check
        %p753 = pneg %p752
      $region42: #{gaussian_bary_affine_transform.1} parent=5 // pred_check_branch
        %755 = sbr.rel (%p753) target = $region44
      $region43: #{gaussian_bary_affine_transform.1} parent=5 // pred_region
        %s756 = ssub.s32 %s13, 2
        // Predicated region
        $region45: #{gaussian_bary_affine_transform.1} parent=43 // pred_check
          %p757 = pneg %p136
        $region46: #{gaussian_bary_affine_transform.1} parent=43 // pred_check_branch
          %759 = sbr.rel (%p757) target = $region48
        $region47: #{gaussian_bary_affine_transform.1} parent=43 // pred_region
          %s760 = sand.u32 %s121, 1
          %s761 = scalar_lea.sflag [#allocation3], %s760
          %s762 = sand.u32 %s121, 1
          %s763 = smul.addr %s762, 128
          %s764 = scalar_lea.vmem [#allocation2], %s763
          %765 = dma.done %s761, 2048
        $region48: #{gaussian_bary_affine_transform.1} parent=43 // pred_fallthru
          _
      $region44: #{gaussian_bary_affine_transform.1} parent=5 // pred_fallthru
        _
    $region6: #{gaussian_bary_affine_transform.1} parent=1 // loop_footer
      %s17 = sadd.s32 1, %s13
    $region7: #{gaussian_bary_affine_transform.1} parent=1 // loop_footer_branch
      %12 = sbr.rel target = $region3
    $region8: #{gaussian_bary_affine_transform.1} parent=1 // loop_exit
      _
    %766 = vsyncpa [#allocation3], 1
    %s767 = scalar_lea.sflag [#allocation3], 1
    %768 = vsyncpa %s767, 1

</llo_original>
